<compile_context>
chip_gen: v7x
topology: tpu7x:2x2x1
jax: 0.10.0
libtpu: 0.0.40
codegen_flags: <defaults>
</compile_context>

<pallas_src>
import numpy as np
import jax
import jax.numpy as jnp
from jax import lax
from jax.experimental import pallas as pl
from jax.experimental.pallas import tpu as pltpu


def _round_up(x, m):
    return ((x + m - 1) // m) * m


# ----------------------------------------------------------------------------
# Kernel 1: row-wise L2 normalization  (matches torch F.cosine_similarity's
# per-vector clamp: 1 / max(||x||, 1e-8) == rsqrt(max(sumsq, 1e-16)))
# ----------------------------------------------------------------------------
def _normalize_kernel(x_ref, o_ref):
    x = x_ref[...].astype(jnp.float32)                         # [TR, Dp]
    sumsq = jnp.sum(x * x, axis=-1, keepdims=True)
    inv = lax.rsqrt(jnp.maximum(sumsq, 1e-16))                 # EUP rsqrt
    o_ref[...] = (x * inv).astype(o_ref.dtype)                 # bf16 MXU operand


def _normalize_rows(x_padded, tile_rows):
    """x_padded: [Np, Dp] f32 (Np % tile_rows == 0, Dp % 128 == 0) -> bf16."""
    Np, Dp = x_padded.shape
    return pl.pallas_call(
        _normalize_kernel,
        out_shape=jax.ShapeDtypeStruct((Np, Dp), jnp.bfloat16),
        grid=(Np // tile_rows,),
        in_specs=[pl.BlockSpec((tile_rows, Dp), lambda i: (i, 0))],
        out_specs=pl.BlockSpec((tile_rows, Dp), lambda i: (i, 0)),
        compiler_params=pltpu.CompilerParams(
            dimension_semantics=("parallel",)),
    )(x_padded)


# ----------------------------------------------------------------------------
# Kernel 2: tiled MXU matmul of the pre-normalized features.
#   sim[q, s] = sum_d q_hat[q, d] * s_hat[s, d]
# Both operands contract on their last (lane) dim -> no transpose / XLU work.
# ----------------------------------------------------------------------------
def _cos_matmul_kernel(q_ref, s_ref, o_ref, acc_ref):
    @pl.when(pl.program_id(2) == 0)
    def _():
        acc_ref[...] = jnp.zeros_like(acc_ref)

    acc_ref[...] += lax.dot_general(
        q_ref[...], s_ref[...],
        dimension_numbers=(((1,), (1,)), ((), ())),
        preferred_element_type=jnp.float32)

    @pl.when(pl.program_id(2) == pl.num_programs(2) - 1)
    def _():
        o_ref[...] = acc_ref[...]


def cosine_similarity_matrix(query_features, support_features):
    """query_features: [Q, D], support_features: [S, D] -> [Q, S] float32."""
    Q, D = query_features.shape
    S, D2 = support_features.shape
    assert D == D2

    # Tile sizes: 256-multiples when the shape allows (fills v6e/v7x 256x256
    # MXU), collapsing to a single lane/sublane-aligned tile for small shapes.
    # Footprint stays a few MiB -> safe for v7x's 64 MiB VMEM as well.
    TQ = 256 if Q > 256 else _round_up(Q, 16)          # bf16 sublane packing
    TS = 256 if S > 256 else _round_up(S, 128)         # lane-dense output tile
    TK = 512 if D > 512 else _round_up(D, 128)

    Qp = _round_up(Q, TQ)
    Sp = _round_up(S, TS)
    Dp = _round_up(D, TK)

    q = jnp.pad(query_features.astype(jnp.float32),
                ((0, Qp - Q), (0, Dp - D)))
    s = jnp.pad(support_features.astype(jnp.float32),
                ((0, Sp - S), (0, Dp - D)))

    # Normalize once (f32 math, bf16 output) so the matmul inner loop is
    # MXU-only; padded (all-zero) rows stay zero.
    q_hat = _normalize_rows(q, TQ)
    s_hat = _normalize_rows(s, TS)

    nq, ns, nk = Qp // TQ, Sp // TS, Dp // TK

    # Explicit VMEM budget: bf16 inputs double-buffered + f32 output
    # double-buffered + f32 accumulator scratch (+ headroom).
    vmem_bytes = (2 * (TQ * TK + TS * TK) * 2
                  + 2 * TQ * TS * 4
                  + TQ * TS * 4)
    vmem_limit = int(min(max(vmem_bytes + (4 << 20), 32 << 20), 100 << 20))

    sim_padded = pl.pallas_call(
        _cos_matmul_kernel,
        out_shape=jax.ShapeDtypeStruct((Qp, Sp), jnp.float32),
        grid=(nq, ns, nk),
        in_specs=[
            pl.BlockSpec((TQ, TK), lambda i, j, k: (i, k)),
            pl.BlockSpec((TS, TK), lambda i, j, k: (j, k)),
        ],
        out_specs=pl.BlockSpec((TQ, TS), lambda i, j, k: (i, j)),
        scratch_shapes=[pltpu.VMEM((TQ, TS), jnp.float32)],
        compiler_params=pltpu.CompilerParams(
            dimension_semantics=("parallel", "parallel", "arbitrary"),
            vmem_limit_bytes=vmem_limit),
        cost_estimate=pl.CostEstimate(
            flops=2 * Qp * Sp * Dp,
            transcendentals=0,
            bytes_accessed=(Qp * Dp + Sp * Dp) * 2 + Qp * Sp * 4),
    )(q_hat, s_hat)

    # Slice away the padded rows/columns.
    return sim_padded[:Q, :S]


# ----------------------------------------------------------------------------
# MatchingClassifier — forward pass semantics of the reference module.
# ----------------------------------------------------------------------------
class MatchingClassifier:
    def __init__(self, mode, shots, seed=-1):
        self.seed = seed
        assert mode.lower() in ['1nn', 'knn']
        self.mode = mode.lower()
        assert isinstance(shots, int)
        assert shots > 0, 'shots_number should be a positive integer'
        self.shots = shots

    def forward(self, support_features, query_features, support_labels,
                query_labels, use_cosine=True):
        if use_cosine:
            # hot path on TPU via Pallas
            sim_dev = cosine_similarity_matrix(query_features, support_features)
            similarity = np.asarray(jax.block_until_ready(sim_dev))
        else:
            # TODO(synk): negative Euclidean distance (-cdist, p=2) path not
            # implemented in Pallas; cosine path is the one exercised here.
            raise NotImplementedError("use_cosine=False path not implemented")

        # ---- host-side episodic bookkeeping (mirrors the reference) ----
        unique_labels = []
        unique_support_labels = {}
        unique_support_labels_reverse = {}
        unique_query_labels = {}
        unique_query_labels_reverse = {}
        annotations = {'support': {}, 'query': {}}
        annotations_reverse = {'support': {}, 'query': {}}

        for i, (class_index, image_index) in enumerate(support_labels):
            if class_index not in unique_labels:
                unique_labels.append(class_index)
            if class_index not in unique_support_labels:
                unique_support_labels[class_index] = []
            if image_index not in unique_support_labels[class_index]:
                unique_support_labels[class_index].append(image_index)
            if image_index not in unique_support_labels_reverse:
                unique_support_labels_reverse[image_index] = class_index
            if image_index not in annotations['support']:
                annotations['support'][image_index] = []
            annotations['support'][image_index].append(i)
            if i not in annotations_reverse['support']:
                annotations_reverse['support'][i] = image_index

        for i, (class_index, image_index) in enumerate(query_labels):
            if class_index not in unique_query_labels:
                unique_query_labels[class_index] = []
            if image_index not in unique_query_labels[class_index]:
                unique_query_labels[class_index].append(image_index)
            if image_index not in unique_query_labels_reverse:
                unique_query_labels_reverse[image_index] = class_index
            if image_index not in annotations['query']:
                annotations['query'][image_index] = []
            annotations['query'][image_index].append(i)
            if i not in annotations_reverse['query']:
                annotations_reverse['query'][i] = image_index

        # reference uses the undefined global `cfg.sampler.n_shots`;
        # we use the module's own `shots` argument (same role).
        n_shots_total = self.shots
        acc = np.zeros(n_shots_total)

        for image_index in annotations['query']:
            for n_shot in range(n_shots_total):
                sampled_support_indices = {}
                for support_class_index in unique_labels:
                    if self.seed > 0:
                        np.random.seed(self.seed)
                    sampled_support_indices[support_class_index] = np.random.choice(
                        unique_support_labels[support_class_index],
                        n_shot + 1, replace=False)

                augmented_support_indices = []
                k_class = {}
                for support_class_index in unique_labels:
                    for index in sampled_support_indices[support_class_index]:
                        for j in annotations['support'][index]:
                            augmented_support_indices.append(j)
                            if support_class_index not in k_class:
                                k_class[support_class_index] = 0
                            k_class[support_class_index] += 1

                if self.mode == '1nn':
                    k_min = 1
                else:
                    k_min = int(np.min(list(k_class.values())))

                augmented_query_indices = []
                for j in annotations['query'][image_index]:
                    augmented_query_indices.append(j)

                similarity_sampled = similarity[augmented_query_indices][:, augmented_support_indices]
                flat = similarity_sampled.flatten()
                order = np.argsort(-flat, kind='stable')[:k_min]
                topk_similarity = flat[order]
                topk_indices = order % similarity_sampled.shape[1]
                topk_crop_indices = [augmented_support_indices[i] for i in topk_indices]
                topk_image_indices = [annotations_reverse['support'][i] for i in topk_crop_indices]
                topk_classes = [unique_support_labels_reverse[i] for i in topk_image_indices]

                classes_count = {}
                for i, c in enumerate(topk_classes):
                    if c not in classes_count:
                        classes_count[c] = [0, 0.0]
                    classes_count[c][0] += 1
                    classes_count[c][1] += float(topk_similarity[i])
                max_count = max([classes_count[c][0] for c in classes_count])
                max_count_classes = [c for c in classes_count if classes_count[c][0] == max_count]
                max_count_classes_distances = {c: classes_count[c][1] for c in max_count_classes}
                support_class = max(max_count_classes_distances,
                                    key=max_count_classes_distances.get)
                if support_class == unique_query_labels_reverse[image_index]:
                    acc[n_shot] += 1

        acc = acc / len(annotations['query'])
        return acc

    __call__ = forward


# ----------------------------------------------------------------------------
if __name__ == "__main__":
    np.random.seed(0)
    key = jax.random.PRNGKey(0)
    k1, k2 = jax.random.split(key)

    # Small synthetic episode:
    #   4 classes, 4 support images per class (1 crop each) -> S = 16
    #   4 classes, 2 query   images per class (1 crop each) -> Q = 8
    #   feature dim D = 128 (lane-aligned)
    n_classes, n_support_per_class, n_query_per_class, D = 4, 4, 2, 128
    S = n_classes * n_support_per_class
    Q = n_classes * n_query_per_class

    support_features = jax.random.normal(k1, (S, D), dtype=jnp.float32)
    query_features = jax.random.normal(k2, (Q, D), dtype=jnp.float32)

    # labels are (class_index, image_index) pairs; image indices are unique.
    support_labels = [(i // n_support_per_class, i) for i in range(S)]
    query_labels = [(i // n_query_per_class, 1000 + i) for i in range(Q)]

    clf = MatchingClassifier(mode='1nn', shots=2, seed=-1)

    # Run the Pallas similarity pipeline once and block on it.
    sim = jax.block_until_ready(
        cosine_similarity_matrix(query_features, support_features))
    assert sim.shape == (Q, S)

    # Sanity: compare against plain-JAX cosine similarity (bf16 operands ->
    # modest tolerance).
    qn = query_features / jnp.maximum(
        jnp.linalg.norm(query_features, axis=-1, keepdims=True), 1e-8)
    sn = support_features / jnp.maximum(
        jnp.linalg.norm(support_features, axis=-1, keepdims=True), 1e-8)
    ref = np.asarray(qn @ sn.T)
    assert np.max(np.abs(np.asarray(sim) - ref)) < 2e-2

    # Full forward (kernel + host-side episodic voting).
    acc = clf(support_features, query_features, support_labels, query_labels,
              use_cosine=True)
    assert acc.shape == (2,)
    assert np.all(acc >= 0.0) and np.all(acc <= 1.0)

    print("KERNEL_OK")
</pallas_src>

<mosaic_0001>
module attributes {stable_mosaic.version = 11 : i64} {
  func.func @_normalize_kernel(%arg0: i32, %arg1: memref<16x128xf32, #tpu.memory_space<vmem>>, %arg2: memref<16x128xbf16, #tpu.memory_space<vmem>>) attributes {dimension_semantics = [#tpu.dimension_semantics<parallel>], iteration_bounds = array<i64: 1>, scalar_prefetch = 0 : i64, scratch_operands = 0 : i64, tpu.core_type = #tpu.core_type<tc>, window_params = [{transform_indices = @transform_0, window_bounds = array<i64: 16, 128>}, {transform_indices = @transform_1, window_bounds = array<i64: 16, 128>}]} {
    %c0 = arith.constant 0 : index
    %c0_0 = arith.constant 0 : index
    %0 = vector.load %arg1[%c0, %c0_0] : memref<16x128xf32, #tpu.memory_space<vmem>>, vector<16x128xf32>
    %1 = arith.mulf %0, %0 : vector<16x128xf32>
    %cst = arith.constant dense<0.000000e+00> : vector<16xf32>
    %2 = vector.multi_reduction <add>, %1, %cst [1] : vector<16x128xf32> to vector<16xf32>
    %3 = vector.shape_cast %2 : vector<16xf32> to vector<16x1xf32>
    %cst_1 = arith.constant 1.000000e-16 : f32
    %4 = vector.broadcast %cst_1 : f32 to vector<16x1xf32>
    %5 = arith.maximumf %3, %4 : vector<16x1xf32>
    %6 = math.rsqrt %5 : vector<16x1xf32>
    %7 = vector.broadcast %6 : vector<16x1xf32> to vector<16x128xf32>
    %8 = arith.mulf %0, %7 : vector<16x128xf32>
    %9 = arith.truncf %8 : vector<16x128xf32> to vector<16x128xbf16>
    %c0_2 = arith.constant 0 : index
    %c0_3 = arith.constant 0 : index
    %10 = vector.load %arg2[%c0_2, %c0_3] : memref<16x128xbf16, #tpu.memory_space<vmem>>, vector<16x128xbf16>
    tpu.vector_store %arg2[%c0_2, %c0_3], %9 {strides = array<i32>} : memref<16x128xbf16, #tpu.memory_space<vmem>>, vector<16x128xbf16>,
    return
  }
  func.func @transform_0(%arg0: i32) -> (i32, i32) {
    %c0_i32 = arith.constant 0 : i32
    %c0_i32_0 = arith.constant 0 : i32
    return %arg0, %c0_i32 : i32, i32
  }
  func.func @transform_1(%arg0: i32) -> (i32, i32) {
    %c0_i32 = arith.constant 0 : i32
    %c0_i32_0 = arith.constant 0 : i32
    return %arg0, %c0_i32 : i32, i32
  }
}

</mosaic_0001>

<llo_original>
// kernel: tpu_custom_call.1
$region0: #{tpu_custom_call.1}
  #allocation0 [shape = 'u32[]', space=smem, size = 0x4, offset = 0x4, fixed_abs, tag = 'smem constant byte address 0x4 - core index']
  #allocation1 [shape = 'u32[144,128]{1,0:T(1,128)}', space=vmem, size = 0x12000, scoped, tag = 'internal scratch']
  %s0 = inlined_call_operand.hbm [shape: f32[16,128], index: 0, kind: input, shape index: {}]
  %s1 = inlined_call_operand.hbm [shape: bf16[16,128], index: 1, kind: output, shape index: {}]
  %s2 = sld [smem:[#allocation0]]
  $region18: #{tpu_custom_call.1} parent=0
    _
  %s4 = ssub.s32 1, %s2
  %s5 = scalar_select 0, %s4, %s2
  $region1: #{tpu_custom_call.1} parent=0
    #allocation2 [shape = 'u8[8192]{0}', space=vmem, size = 0x2000, scoped, tag = 'input window, operand 0, single buffered']
    #allocation3 [shape = 's32[1]{0}', space=sflag, size = 0x4, scoped, tag = 'scoped memory for tpu_custom_call.1']
    #allocation4 [shape = 's32[1]{0}', space=sflag, size = 0x4, scoped, tag = 'scoped memory for tpu_custom_call.1']
    #allocation5 [shape = 'u8[4096]{0}', space=vmem, size = 0x1000, scoped, tag = 'output window, operand 0, single buffered']
    %6 = vsyncpa [#allocation3], 0
    %7 = vsyncpa [#allocation4], 0
    // Predicated region
    $region2: #{tpu_custom_call.1} parent=1 // pred_check
      _
    $region3: #{tpu_custom_call.1} parent=1 // pred_check_branch
      %9 = sbr.rel (0) target = $region5
    $region4: #{tpu_custom_call.1} parent=1 // pred_region
      %s11 = ssub.s32 256, 256
      %12 = vsyncadd [#allocation3], %s11
      %s13 = sshll.u32 [#allocation2], 4
      %s14 = int_to_ptr.vmem [resolvable:$true] %s13
      %19 = dma.hbm_to_vmem [thread:$0]  %s0, 256, %s14, [#allocation3], 128, 128, 8
    $region5: #{tpu_custom_call.1} parent=1 // pred_fallthru
      _
    // Predicated region
    $region6: #{tpu_custom_call.1} parent=1 // pred_check
      _
    $region7: #{tpu_custom_call.1} parent=1 // pred_check_branch
      %21 = sbr.rel (0) target = $region9
    $region8: #{tpu_custom_call.1} parent=1 // pred_region
      %22 = dma.done [#allocation3], 256
    $region9: #{tpu_custom_call.1} parent=1 // pred_fallthru
      _
    %v23 = vld [vmem:[#allocation2] sm:$0xff]
    %v24 = vld [vmem:[#allocation2 + $0x8] sm:$0xff]
    %v25 = vmul.f32 %v23, %v23
    %v26 = vmul.f32 %v24, %v24
    %27 = vadd.xlane.f32.xlu0 %v25
    %v28 = vpop.xlane.xlu0 %27
    %29 = vadd.xlane.f32.xlu0 %v26
    %v30 = vpop.xlane.xlu0 %29
    %v31 = vmax.f32 %v28, 1e-16
    %v32 = vmax.f32 %v30, 1e-16
    %v33 = vrsqrt.pop %v31
    %v34 = vrsqrt.pop %v32
    %v35 = vmul.f32 %v23, %v33
    %v36 = vmul.f32 %v24, %v34
    %v37 = vpack.c.bf16 %v36, %v35
    %v39 = vunpack.c.l.b16 %v37
    %v40 = vunpack.c.h.b16 %v37
    %v41 = vpack.c.b16 %v39, %v39
    %v42 = vpack.c.b16 %v40, %v40
    %45 = vst [vmem:[#allocation5] sm:$0xf] %v41
    %46 = vst [vmem:[#allocation5 + $0x4] sm:$0xf] %v42
    // Predicated region
    $region10: #{tpu_custom_call.1} parent=1 // pred_check
      _
    $region11: #{tpu_custom_call.1} parent=1 // pred_check_branch
      %48 = sbr.rel (0) target = $region13
    $region12: #{tpu_custom_call.1} parent=1 // pred_region
      %s50 = ssub.s32 128, 128
      %51 = vsyncadd [#allocation4], %s50
      %s52 = sshll.u32 [#allocation5], 4
      %s53 = int_to_ptr.vmem [resolvable:$true] %s52
      %58 = dma.vmem_to_hbm [thread:$0]  %s53, 128, %s1, [#allocation4], 64, 64, 4
    $region13: #{tpu_custom_call.1} parent=1 // pred_fallthru
      _
    // Predicated region
    $region14: #{tpu_custom_call.1} parent=1 // pred_check
      _
    $region15: #{tpu_custom_call.1} parent=1 // pred_check_branch
      %60 = sbr.rel (0) target = $region17
    $region16: #{tpu_custom_call.1} parent=1 // pred_region
      %61 = dma.done [#allocation4], 128
    $region17: #{tpu_custom_call.1} parent=1 // pred_fallthru
      _
    %62 = vsyncpa [#allocation3], 1
    %63 = vsyncpa [#allocation4], 1

</llo_original>
